<compile_context>
chip_gen: v7x
topology: tpu7x:2x2x1
jax: 0.10.0
libtpu: 0.0.40
codegen_flags: <defaults>
</compile_context>

<pallas_src>
import functools
import math

import jax
import jax.numpy as jnp
from jax.experimental import pallas as pl
from jax.experimental.pallas import tpu as pltpu


# ~1-2 MiB per pipeline buffer already sits at ~85% of the HBM roofline;
# larger tiles only raise VMEM pressure (v7x: 64 MiB physical VMEM).
_TILE_TARGET_BYTES = 2 * 1024 * 1024
# Minimum grid steps so the pipeline overlaps DMA and both v7x TensorCores
# get work when the grid axes are marked "parallel".
_MIN_GRID_STEPS = 8


def _sublane(itemsize):
    # sublane packing granularity: 8 (4B), 16 (2B), 32 (1B)
    return max(8, 32 // max(int(itemsize), 1))


def _vmem_limit_bytes(tile_elems, in_itemsize, out_itemsize):
    """Scoped-VMEM override sized from the real footprint, not a flat 48 MiB."""
    footprint = (
        2 * tile_elems * in_itemsize      # double-buffered input tiles
        + 2 * tile_elems * out_itemsize   # double-buffered output tiles
        + 3 * tile_elems * 4              # fp32 upcast + elementwise temporaries
    )
    footprint += 8 * 1024 * 1024          # compiler-internal scratch margin
    # >=24 MiB covers v5e's 16 MiB scoped default; <=32 MiB keeps ample
    # headroom inside v7x's 64 MiB physical VMEM.
    return int(min(max(footprint, 24 * 1024 * 1024), 32 * 1024 * 1024))


# ----------------------------------------------------------------------------
# Kernels (single-pass statistics: mean and E[x^2] from one read of the tile)
# ----------------------------------------------------------------------------

def _ln_lanes_kernel(x_ref, w_ref, b_ref, o_ref, *, eps, inv_c):
    """channels_last: x_ref (block_rows, C); normalize over the lane dim C."""
    x = x_ref[...].astype(jnp.float32)
    mean = jnp.sum(x, axis=-1, keepdims=True) * inv_c
    meansq = jnp.sum(x * x, axis=-1, keepdims=True) * inv_c
    var = jnp.maximum(meansq - mean * mean, 0.0)          # biased variance (matches torch)
    inv = jax.lax.rsqrt(var + eps)
    o_ref[...] = ((x - mean) * inv * w_ref[...] + b_ref[...]).astype(o_ref.dtype)


def _ln_sublanes_kernel(x_ref, w_ref, b_ref, o_ref, *, eps, inv_c):
    """channels_first: x_ref (C, TS); normalize over the leading (C) dim."""
    x = x_ref[...].astype(jnp.float32)
    mean = jnp.sum(x, axis=0, keepdims=True) * inv_c       # (1, TS)
    meansq = jnp.sum(x * x, axis=0, keepdims=True) * inv_c
    var = jnp.maximum(meansq - mean * mean, 0.0)            # biased variance
    inv = jax.lax.rsqrt(var + eps)
    # w_ref / b_ref: (C, 1) fp32, broadcast along lanes.
    o_ref[...] = ((x - mean) * inv * w_ref[...] + b_ref[...]).astype(o_ref.dtype)


# ----------------------------------------------------------------------------
# Tile sizing
# ----------------------------------------------------------------------------

def _pick_block_rows(rows, row_elems, itemsize):
    """Row-tile: <= ~2 MiB per buffer, sublane-aligned, and >= ~8 grid steps."""
    sub = _sublane(itemsize)
    row_bytes = max(row_elems * itemsize, 1)
    by_bytes = _TILE_TARGET_BYTES // row_bytes
    by_steps = -(-rows // _MIN_GRID_STEPS)                  # ceil(rows / MIN_STEPS)
    blk = max(sub, (min(by_bytes, by_steps) // sub) * sub)
    if blk >= rows:
        return rows                                         # single full block (legal)
    return blk


def _pick_spatial_tile(S, C, N, itemsize):
    """Spatial (lane) tile for channels_first: multiple of 128, ~2 MiB,
    and enough steps so N * ceil(S/ts) >= ~MIN_GRID_STEPS when possible."""
    if S <= 128:
        return S                                            # full spatial extent on lanes
    col_bytes = max(C * itemsize, 1)
    by_bytes = max(128, (_TILE_TARGET_BYTES // col_bytes) // 128 * 128)
    k = max(1, -(-_MIN_GRID_STEPS // max(N, 1)))            # wanted steps per image
    per_step = S // k
    by_steps = max(128, (per_step // 128) * 128)
    ts = min(by_bytes, by_steps)
    ts = min(ts, max(128, (S // 128) * 128))                # never exceed S (S > 128 here)
    return max(128, ts)


# ----------------------------------------------------------------------------
# Wrappers
# ----------------------------------------------------------------------------

def _layernorm_channels_last_2d(x2d, w_row, b_row, eps):
    rows, C = x2d.shape
    itemsize = jnp.dtype(x2d.dtype).itemsize
    block_rows = _pick_block_rows(rows, C, itemsize)
    grid = (pl.cdiv(rows, block_rows),)                     # ragged last block masked by Pallas
    tile_elems = block_rows * C

    return pl.pallas_call(
        functools.partial(_ln_lanes_kernel, eps=eps, inv_c=1.0 / C),
        out_shape=jax.ShapeDtypeStruct((rows, C), x2d.dtype),
        grid_spec=pltpu.PrefetchScalarGridSpec(
            num_scalar_prefetch=0,
            grid=grid,
            in_specs=[
                pl.BlockSpec((block_rows, C), lambda i: (i, 0)),
                pl.BlockSpec((1, C), lambda i: (0, 0)),
                pl.BlockSpec((1, C), lambda i: (0, 0)),
            ],
            out_specs=pl.BlockSpec((block_rows, C), lambda i: (i, 0)),
        ),
        compiler_params=pltpu.CompilerParams(
            dimension_semantics=("parallel",),
            vmem_limit_bytes=_vmem_limit_bytes(tile_elems, itemsize, itemsize),
        ),
        cost_estimate=pl.CostEstimate(
            flops=int(10 * rows * C),
            transcendentals=int(rows),                       # one rsqrt per row
            bytes_accessed=int(2 * rows * C * itemsize + 2 * C * 4),
        ),
    )(x2d, w_row, b_row)


def _layernorm_channels_first_nchw(x, w_col, b_col, eps):
    N, C, H, W = x.shape
    S = H * W
    x3 = x.reshape(N, C, S)                                  # free reshape (contiguous minor dims)
    itemsize = jnp.dtype(x.dtype).itemsize
    ts = _pick_spatial_tile(S, C, N, itemsize)
    grid = (N, pl.cdiv(S, ts))
    tile_elems = C * ts

    out3 = pl.pallas_call(
        functools.partial(_ln_sublanes_kernel, eps=eps, inv_c=1.0 / C),
        out_shape=jax.ShapeDtypeStruct((N, C, S), x.dtype),
        grid_spec=pltpu.PrefetchScalarGridSpec(
            num_scalar_prefetch=0,
            grid=grid,
            in_specs=[
                pl.BlockSpec((None, C, ts), lambda n, s: (n, 0, s)),   # N dim squeezed
                pl.BlockSpec((C, 1), lambda n, s: (0, 0)),
                pl.BlockSpec((C, 1), lambda n, s: (0, 0)),
            ],
            out_specs=pl.BlockSpec((None, C, ts), lambda n, s: (n, 0, s)),
        ),
        compiler_params=pltpu.CompilerParams(
            dimension_semantics=("parallel", "parallel"),
            vmem_limit_bytes=_vmem_limit_bytes(tile_elems, itemsize, itemsize),
        ),
        cost_estimate=pl.CostEstimate(
            flops=int(10 * N * C * S),
            transcendentals=int(N * S),                      # one rsqrt per spatial position
            bytes_accessed=int(2 * N * C * S * itemsize + 2 * C * 4),
        ),
    )(x3, w_col, b_col)
    return out3.reshape(N, C, H, W)


class PallasLayerNorm:
    """JAX/Pallas port of the ConvNeXt LayerNorm module used by davit."""

    def __init__(self, normalized_shape, eps=1e-06, data_format="channels_last"):
        if data_format not in ("channels_last", "channels_first"):
            raise NotImplementedError
        self.eps = float(eps)
        self.data_format = data_format
        self.normalized_shape = (normalized_shape,)
        C = normalized_shape
        # deterministic init matching nn.Parameter(torch.ones/zeros(normalized_shape))
        self.weight = jnp.ones((C,), dtype=jnp.float32)
        self.bias = jnp.zeros((C,), dtype=jnp.float32)
        # Hoisted, pre-reshaped fp32 copies for the kernels (avoids tiny per-call
        # cast/reshape XLA ops -- LN is invoked many times per DaViT block).
        if data_format == "channels_last":
            self._w_row = self.weight.reshape(1, C)
            self._b_row = self.bias.reshape(1, C)
        else:
            self._w_col = self.weight.reshape(C, 1)
            self._b_col = self.bias.reshape(C, 1)

    def __call__(self, x):
        C = self.normalized_shape[0]
        if self.data_format == "channels_last":
            assert x.shape[-1] == C
            shape = x.shape
            y = _layernorm_channels_last_2d(
                x.reshape(-1, C), self._w_row, self._b_row, self.eps)
            return y.reshape(shape)
        else:
            assert x.ndim == 4 and x.shape[1] == C
            return _layernorm_channels_first_nchw(
                x, self._w_col, self._b_col, self.eps)


# ----------------------------------------------------------------------------
# References + self-test
# ----------------------------------------------------------------------------

def _reference_channels_first(x, w, b, eps):
    x = x.astype(jnp.float32)
    u = x.mean(axis=1, keepdims=True)
    s = ((x - u) ** 2).mean(axis=1, keepdims=True)
    xn = (x - u) / jnp.sqrt(s + eps)
    return w[None, :, None, None] * xn + b[None, :, None, None]


def _reference_channels_last(x, w, b, eps):
    x = x.astype(jnp.float32)
    u = x.mean(axis=-1, keepdims=True)
    s = ((x - u) ** 2).mean(axis=-1, keepdims=True)
    xn = (x - u) / jnp.sqrt(s + eps)
    return xn * w + b


if __name__ == "__main__":
    key = jax.random.PRNGKey(0)
    k1, k2, k3, k4, k5 = jax.random.split(key, 5)

    N, C, H, W = 2, 4, 16, 16

    # channels_first (NCHW) path -- NCHW-native tiling, no transposes.
    x_cf = jax.random.normal(k1, (N, C, H, W), dtype=jnp.float32)
    ln_cf = PallasLayerNorm(C, eps=1e-6, data_format="channels_first")
    y_cf = jax.block_until_ready(ln_cf(x_cf))
    ref_cf = _reference_channels_first(x_cf, ln_cf.weight, ln_cf.bias, ln_cf.eps)
    assert y_cf.shape == (N, C, H, W)
    assert jnp.max(jnp.abs(y_cf - ref_cf)) < 1e-4

    # channels_last (NHWC) path, tiny C.
    x_cl = jax.random.normal(k2, (N, H, W, C), dtype=jnp.float32)
    ln_cl = PallasLayerNorm(C, eps=1e-6, data_format="channels_last")
    y_cl = jax.block_until_ready(ln_cl(x_cl))
    ref_cl = _reference_channels_last(x_cl, ln_cl.weight, ln_cl.bias, ln_cl.eps)
    assert y_cl.shape == (N, H, W, C)
    assert jnp.max(jnp.abs(y_cl - ref_cl)) < 1e-4

    # channels_last with a DaViT-like embed dim (C >= 128, lane-dense stores).
    x_ed = jax.random.normal(k3, (2, 8, 8, 192), dtype=jnp.float32)
    ln_ed = PallasLayerNorm(192, eps=1e-6, data_format="channels_last")
    y_ed = jax.block_until_ready(ln_ed(x_ed))
    ref_ed = _reference_channels_last(x_ed, ln_ed.weight, ln_ed.bias, ln_ed.eps)
    assert jnp.max(jnp.abs(y_ed - ref_ed)) < 1e-4

    # Ragged row count (rows=105, block=8) -- exercises Pallas edge-block masking.
    x_rg = jax.random.normal(k4, (3, 5, 7, 32), dtype=jnp.float32)
    ln_rg = PallasLayerNorm(32, eps=1e-6, data_format="channels_last")
    y_rg = jax.block_until_ready(ln_rg(x_rg))
    ref_rg = _reference_channels_last(x_rg, ln_rg.weight, ln_rg.bias, ln_rg.eps)
    assert jnp.max(jnp.abs(y_rg - ref_rg)) < 1e-4

    # bf16 I/O (fp32 compute inside the kernel) -- halves HBM traffic.
    x_bf = jax.random.normal(k5, (N, C, H, W), dtype=jnp.bfloat16)
    ln_bf = PallasLayerNorm(C, eps=1e-6, data_format="channels_first")
    y_bf = jax.block_until_ready(ln_bf(x_bf))
    assert y_bf.dtype == jnp.bfloat16
    ref_bf = _reference_channels_first(x_bf, ln_bf.weight, ln_bf.bias, ln_bf.eps)
    assert jnp.max(jnp.abs(y_bf.astype(jnp.float32) - ref_bf)) < 5e-2

    print("KERNEL_OK")
</pallas_src>

<mosaic_0001>
module attributes {stable_mosaic.version = 11 : i64} {
  func.func @_ln_sublanes_kernel(%arg0: i32, %arg1: i32, %arg2: memref<1x4x128xf32, #tpu.memory_space<vmem>>, %arg3: memref<4x1xf32, #tpu.memory_space<vmem>>, %arg4: memref<4x1xf32, #tpu.memory_space<vmem>>, %arg5: memref<1x4x128xf32, #tpu.memory_space<vmem>>) attributes {dimension_semantics = [#tpu.dimension_semantics<parallel>, #tpu.dimension_semantics<parallel>], iteration_bounds = array<i64: 2, 2>, scalar_prefetch = 0 : i64, scratch_operands = 0 : i64, tpu.core_type = #tpu.core_type<tc>, window_params = [{transform_indices = @transform_0, window_bounds = array<i64: 1, 4, 128>}, {pipeline_mode = #tpu.pipeline_mode<synchronous>, transform_indices = @transform_1, window_bounds = array<i64: 4, 1>}, {pipeline_mode = #tpu.pipeline_mode<synchronous>, transform_indices = @transform_2, window_bounds = array<i64: 4, 1>}, {transform_indices = @transform_3, window_bounds = array<i64: 1, 4, 128>}]} {
    %c0 = arith.constant 0 : index
    %c0_0 = arith.constant 0 : index
    %c0_1 = arith.constant 0 : index
    %0 = vector.load %arg2[%c0, %c0_0, %c0_1] : memref<1x4x128xf32, #tpu.memory_space<vmem>>, vector<1x4x128xf32>
    %1 = vector.shape_cast %0 : vector<1x4x128xf32> to vector<4x128xf32>
    %cst = arith.constant dense<0.000000e+00> : vector<128xf32>
    %2 = vector.multi_reduction <add>, %1, %cst [0] : vector<4x128xf32> to vector<128xf32>
    %3 = vector.shape_cast %2 : vector<128xf32> to vector<1x128xf32>
    %cst_2 = arith.constant 2.500000e-01 : f32
    %4 = vector.broadcast %cst_2 : f32 to vector<1x128xf32>
    %5 = arith.mulf %3, %4 : vector<1x128xf32>
    %6 = arith.mulf %1, %1 : vector<4x128xf32>
    %cst_3 = arith.constant dense<0.000000e+00> : vector<128xf32>
    %7 = vector.multi_reduction <add>, %6, %cst_3 [0] : vector<4x128xf32> to vector<128xf32>
    %8 = vector.shape_cast %7 : vector<128xf32> to vector<1x128xf32>
    %cst_4 = arith.constant 2.500000e-01 : f32
    %9 = vector.broadcast %cst_4 : f32 to vector<1x128xf32>
    %10 = arith.mulf %8, %9 : vector<1x128xf32>
    %11 = arith.mulf %5, %5 : vector<1x128xf32>
    %12 = arith.subf %10, %11 : vector<1x128xf32>
    %cst_5 = arith.constant 0.000000e+00 : f32
    %13 = vector.broadcast %cst_5 : f32 to vector<1x128xf32>
    %14 = arith.maximumf %12, %13 : vector<1x128xf32>
    %cst_6 = arith.constant 9.99999997E-7 : f32
    %15 = vector.broadcast %cst_6 : f32 to vector<1x128xf32>
    %16 = arith.addf %14, %15 : vector<1x128xf32>
    %17 = math.rsqrt %16 : vector<1x128xf32>
    %18 = vector.broadcast %5 : vector<1x128xf32> to vector<4x128xf32>
    %19 = arith.subf %1, %18 : vector<4x128xf32>
    %20 = vector.broadcast %17 : vector<1x128xf32> to vector<4x128xf32>
    %21 = arith.mulf %19, %20 : vector<4x128xf32>
    %c0_7 = arith.constant 0 : index
    %c0_8 = arith.constant 0 : index
    %22 = vector.load %arg3[%c0_7, %c0_8] : memref<4x1xf32, #tpu.memory_space<vmem>>, vector<4x1xf32>
    %23 = vector.broadcast %22 : vector<4x1xf32> to vector<4x128xf32>
    %24 = arith.mulf %21, %23 : vector<4x128xf32>
    %c0_9 = arith.constant 0 : index
    %c0_10 = arith.constant 0 : index
    %25 = vector.load %arg4[%c0_9, %c0_10] : memref<4x1xf32, #tpu.memory_space<vmem>>, vector<4x1xf32>
    %26 = vector.broadcast %25 : vector<4x1xf32> to vector<4x128xf32>
    %27 = arith.addf %24, %26 : vector<4x128xf32>
    %c0_11 = arith.constant 0 : index
    %c0_12 = arith.constant 0 : index
    %c0_13 = arith.constant 0 : index
    %28 = vector.load %arg5[%c0_11, %c0_12, %c0_13] : memref<1x4x128xf32, #tpu.memory_space<vmem>>, vector<1x4x128xf32>
    %29 = vector.shape_cast %28 : vector<1x4x128xf32> to vector<4x128xf32>
    %30 = vector.shape_cast %27 : vector<4x128xf32> to vector<1x4x128xf32>
    tpu.vector_store %arg5[%c0_11, %c0_12, %c0_13], %30 {strides = array<i32>} : memref<1x4x128xf32, #tpu.memory_space<vmem>>, vector<1x4x128xf32>,
    return
  }
  func.func @transform_0(%arg0: i32, %arg1: i32) -> (i32, i32, i32) {
    %c0_i32 = arith.constant 0 : i32
    %c0_i32_0 = arith.constant 0 : i32
    return %arg0, %c0_i32, %arg1 : i32, i32, i32
  }
  func.func @transform_1(%arg0: i32, %arg1: i32) -> (i32, i32) {
    %c0_i32 = arith.constant 0 : i32
    %c0_i32_0 = arith.constant 0 : i32
    %c0_i32_1 = arith.constant 0 : i32
    return %c0_i32, %c0_i32_0 : i32, i32
  }
  func.func @transform_2(%arg0: i32, %arg1: i32) -> (i32, i32) {
    %c0_i32 = arith.constant 0 : i32
    %c0_i32_0 = arith.constant 0 : i32
    %c0_i32_1 = arith.constant 0 : i32
    return %c0_i32, %c0_i32_0 : i32, i32
  }
  func.func @transform_3(%arg0: i32, %arg1: i32) -> (i32, i32, i32) {
    %c0_i32 = arith.constant 0 : i32
    %c0_i32_0 = arith.constant 0 : i32
    return %arg0, %c0_i32, %arg1 : i32, i32, i32
  }
}

</mosaic_0001>

<llo_original>
// kernel: tpu_custom_call.1
$region0: #{tpu_custom_call.1}
  #allocation0 [shape = 'u32[]', space=smem, size = 0x4, offset = 0x4, fixed_abs, tag = 'smem constant byte address 0x4 - core index']
  #allocation1 [shape = 'u32[144,128]{1,0:T(1,128)}', space=vmem, size = 0x12000, scoped, tag = 'internal scratch']
  %s0 = inlined_call_operand.hbm [shape: f32[2,4,256], index: 0, kind: input, shape index: {}]
  %s1 = inlined_call_operand.vmem [shape: f32[4,1], index: 1, kind: input, shape index: {}]
  %s2 = inlined_call_operand.vmem [shape: f32[4,1], index: 2, kind: input, shape index: {}]
  %s3 = inlined_call_operand.hbm [shape: f32[2,4,256], index: 3, kind: output, shape index: {}]
  %s4 = sld [smem:[#allocation0]]
  $region49: #{tpu_custom_call.1} parent=0
    _
  %s6 = ssub.s32 1, %s4
  %s7 = scalar_select 0, %s6, %s4
  $region1: #{tpu_custom_call.1} parent=0
    #allocation2 [shape = 'u8[4096]{0}', space=vmem, size = 0x1000, scoped, tag = 'input window, operand 0']
    #allocation3 [shape = 's32[2]{0}', space=sflag, size = 0x8, scoped, tag = 'scoped memory for tpu_custom_call.1']
    #allocation4 [shape = 's32[2]{0}', space=sflag, size = 0x8, scoped, tag = 'scoped memory for tpu_custom_call.1']
    #allocation5 [shape = 'u8[4096]{0}', space=vmem, size = 0x1000, scoped, tag = 'output window, operand 0']
    %8 = vsyncpa [#allocation3], 0
    %s9 = scalar_lea.sflag [#allocation3], 1
    %10 = vsyncpa %s9, 0
    %11 = vsyncpa [#allocation4], 0
    %s12 = scalar_lea.sflag [#allocation4], 1
    %13 = vsyncpa %s12, 0
    loop: start=0, step=1, limit=6
    $region2: #{tpu_custom_call.1} parent=1 // loop_pre_header
      _
    $region3: #{tpu_custom_call.1} parent=1 // loop_header
      %s15 = sphi 0, %s19
      %p16 = scmp.ge.s32.totalorder %s15, 6
      %s22 = sphi 0, %s34
      %s23 = sphi 0, %s30
      %s24 = sphi 0, %s22
      %s25 = sphi 0, %s23
      %s26 = sphi 0, %s24
      %s27 = sphi 0, %s25
      %s39 = sphi 0, %s41
      %s42 = sphi 0, %s39
      %s43 = sphi 0, %s42
      %s59 = sphi 0, %s43
      %s63 = sphi 0, %s63
      %s65 = sphi 0, %s63
      %s66 = sphi 0, %s65
      %s80 = sphi 0, %s66
      %s84 = sphi 0, %s84
      %s86 = sphi 0, %s84
      %s87 = sphi 0, %s86
      %s101 = sphi 0, %s87
      %s109 = sphi 0, %s111
      %s112 = sphi 0, %s109
      %s113 = sphi 0, %s112
      %s129 = sphi 0, %s113
    $region4: #{tpu_custom_call.1} parent=1 // loop_header_branch
      %18 = sbr.rel (%p16) target = $region8
    $region5: #{tpu_custom_call.1} parent=1 // loop_body
      %s20 = ssub.s32 %s15, 1
      %s21 = ssub.s32 %s15, 2
      %s28 = sadd.s32 1, %s23
      %p29 = scmp.ge.s32.totalorder %s28, 2
      %s30 = scalar_select %p29, 0, %s28
      %s31 = sadd.s32 1, %s22
      %s32 = scalar_select %p29, %s31, %s22
      %p33 = scmp.ge.s32.totalorder %s32, 2
      %s34 = scalar_select %p33, 0, %s32
      %s35 = ssub.s32 %s22, %s34
      %s36 = ssub.s32 %s23, %s30
      %s37 = sor.u32 %s35, %s36
      %p38 = scmp.eq.s32.totalorder %s37, 0
      %s40 = sadd.s32 %s39, 1
      %s41 = scalar_select %p38, %s39, %s40
      %p44 = pneg %p38
      %p45 = scmp.eq.s32.totalorder %s15, 3
      %p46 = por %p44, %p45
      %p47 = scmp.ne.s32.totalorder %s39, %s42
      %p48 = scmp.eq.s32.totalorder %s15, 0
      %p49 = por %p47, %p48
      %p50 = scmp.ne.s32.totalorder %s39, %s42
      %p51 = scmp.eq.s32.totalorder %s20, 3
      %p52 = por %p50, %p51
      %p53 = scmp.ne.s32.totalorder %s42, %s43
      %p54 = scmp.eq.s32.totalorder %s20, 0
      %p55 = por %p53, %p54
      %p56 = scmp.ne.s32.totalorder %s42, %s43
      %p57 = scmp.eq.s32.totalorder %s21, 3
      %p58 = por %p56, %p57
      %p60 = scmp.ne.s32.totalorder %s43, %s59
      %p61 = scmp.eq.s32.totalorder %s21, 0
      %p62 = por %p60, %p61
      %s64 = sadd.s32 %s63, 1
      %p67 = scmp.eq.s32.totalorder %s15, 3
      %p68 = scmp.ne.s32.totalorder %s63, %s65
      %p69 = scmp.eq.s32.totalorder %s15, 0
      %p70 = por %p68, %p69
      %p71 = scmp.ne.s32.totalorder %s63, %s65
      %p72 = scmp.eq.s32.totalorder %s20, 3
      %p73 = por %p71, %p72
      %p74 = scmp.ne.s32.totalorder %s65, %s66
      %p75 = scmp.eq.s32.totalorder %s20, 0
      %p76 = por %p74, %p75
      %p77 = scmp.ne.s32.totalorder %s65, %s66
      %p78 = scmp.eq.s32.totalorder %s21, 3
      %p79 = por %p77, %p78
      %p81 = scmp.ne.s32.totalorder %s66, %s80
      %p82 = scmp.eq.s32.totalorder %s21, 0
      %p83 = por %p81, %p82
      %s85 = sadd.s32 %s84, 1
      %p88 = scmp.eq.s32.totalorder %s15, 3
      %p89 = scmp.ne.s32.totalorder %s84, %s86
      %p90 = scmp.eq.s32.totalorder %s15, 0
      %p91 = por %p89, %p90
      %p92 = scmp.ne.s32.totalorder %s84, %s86
      %p93 = scmp.eq.s32.totalorder %s20, 3
      %p94 = por %p92, %p93
      %p95 = scmp.ne.s32.totalorder %s86, %s87
      %p96 = scmp.eq.s32.totalorder %s20, 0
      %p97 = por %p95, %p96
      %p98 = scmp.ne.s32.totalorder %s86, %s87
      %p99 = scmp.eq.s32.totalorder %s21, 3
      %p100 = por %p98, %p99
      %p102 = scmp.ne.s32.totalorder %s87, %s101
      %p103 = scmp.eq.s32.totalorder %s21, 0
      %p104 = por %p102, %p103
      %s105 = ssub.s32 %s22, %s34
      %s106 = ssub.s32 %s23, %s30
      %s107 = sor.u32 %s105, %s106
      %p108 = scmp.eq.s32.totalorder %s107, 0
      %s110 = sadd.s32 %s109, 1
      %s111 = scalar_select %p108, %s109, %s110
      %p114 = pneg %p108
      %p115 = scmp.eq.s32.totalorder %s15, 3
      %p116 = por %p114, %p115
      %p117 = scmp.ne.s32.totalorder %s109, %s112
      %p118 = scmp.eq.s32.totalorder %s15, 0
      %p119 = por %p117, %p118
      %p120 = scmp.ne.s32.totalorder %s109, %s112
      %p121 = scmp.eq.s32.totalorder %s20, 3
      %p122 = por %p120, %p121
      %p123 = scmp.ne.s32.totalorder %s112, %s113
      %p124 = scmp.eq.s32.totalorder %s20, 0
      %p125 = por %p123, %p124
      %p126 = scmp.ne.s32.totalorder %s112, %s113
      %p127 = scmp.eq.s32.totalorder %s21, 3
      %p128 = por %p126, %p127
      %p130 = scmp.ne.s32.totalorder %s113, %s129
      %p131 = scmp.eq.s32.totalorder %s21, 0
      %p132 = por %p130, %p131
      %p133 = scmp.le.s32.totalorder 1, %s15
      %p134 = scmp.lt.s32.totalorder %s15, 5
      %p135 = pnand %p133, %p134
      %p136 = pneg %p135
      // Predicated region
      $region9: #{tpu_custom_call.1} parent=5 // pred_check
        _
      $region10: #{tpu_custom_call.1} parent=5 // pred_check_branch
        %138 = sbr.rel (%p135) target = $region12
      $region11: #{tpu_custom_call.1} parent=5 // pred_region
        %s139 = ssub.s32 %s15, 1
        // Predicated region
        $region13: #{tpu_custom_call.1} parent=11 // pred_check
          %p140 = pneg %p76
        $region14: #{tpu_custom_call.1} parent=11 // pred_check_branch
          %142 = sbr.rel (%p140) target = $region16
        $region15: #{tpu_custom_call.1} parent=11 // pred_region
          _
        $region16: #{tpu_custom_call.1} parent=11 // pred_fallthru
          _
        // Predicated region
        $region17: #{tpu_custom_call.1} parent=11 // pred_check
          %p143 = pneg %p97
        $region18: #{tpu_custom_call.1} parent=11 // pred_check_branch
          %145 = sbr.rel (%p143) target = $region20
        $region19: #{tpu_custom_call.1} parent=11 // pred_region
          _
        $region20: #{tpu_custom_call.1} parent=11 // pred_fallthru
          _
      $region12: #{tpu_custom_call.1} parent=5 // pred_fallthru
        _
      %p146 = scmp.lt.s32.totalorder %s15, 4
      // Predicated region
      $region21: #{tpu_custom_call.1} parent=5 // pred_check
        %p147 = pneg %p146
      $region22: #{tpu_custom_call.1} parent=5 // pred_check_branch
        %149 = sbr.rel (%p147) target = $region24
      $region23: #{tpu_custom_call.1} parent=5 // pred_region
        // Predicated region
        $region25: #{tpu_custom_call.1} parent=23 // pred_check
          %p150 = pneg %p49
        $region26: #{tpu_custom_call.1} parent=23 // pred_check_branch
          %152 = sbr.rel (%p150) target = $region28
        $region27: #{tpu_custom_call.1} parent=23 // pred_region
          %s153 = sand.u32 %s39, 1
          %s154 = scalar_lea.sflag [#allocation3], %s153
          %s155 = sand.u32 %s39, 1
          %s156 = smul.addr %s155, 4
          %s157 = scalar_lea.vmem [#allocation2], %s156
          %s159 = ssub.s32 64, 64
          %160 = vsyncadd %s154, %s159
          %s161 = smul.addr %s22, 2
          %s162 = sadd.s32 %s23, %s161
          %s163 = smul.addr %s162, 64
          %s164 = scalar_lea.hbm %s0, %s163
          %s166 = sshll.u32 %s157, 4
          %s167 = int_to_ptr.vmem [resolvable:$true] %s166
          %169 = dma.hbm_to_vmem [thread:$0]  %s164, 64, %s167, %s154
        $region28: #{tpu_custom_call.1} parent=23 // pred_fallthru
          _
      $region24: #{tpu_custom_call.1} parent=5 // pred_fallthru
        _
      %p170 = scmp.le.s32.totalorder 1, %s15
      %p171 = scmp.lt.s32.totalorder %s15, 5
      %p172 = pnand %p170, %p171
      %p173 = pneg %p172
      // Predicated region
      $region29: #{tpu_custom_call.1} parent=5 // pred_check
        _
      $region30: #{tpu_custom_call.1} parent=5 // pred_check_branch
        %175 = sbr.rel (%p172) target = $region32
      $region31: #{tpu_custom_call.1} parent=5 // pred_region
        %s176 = ssub.s32 %s15, 1
        %s177 = sand.u32 %s42, 1
        %s178 = scalar_lea.sflag [#allocation3], %s177
        %s179 = sand.u32 %s42, 1
        %s180 = smul.addr %s179, 4
        %s181 = scalar_lea.vmem [#allocation2], %s180
        // Predicated region
        $region33: #{tpu_custom_call.1} parent=31 // pred_check
          %p182 = pneg %p55
        $region34: #{tpu_custom_call.1} parent=31 // pred_check_branch
          %184 = sbr.rel (%p182) target = $region36
        $region35: #{tpu_custom_call.1} parent=31 // pred_region
          %185 = dma.done %s178, 64
        $region36: #{tpu_custom_call.1} parent=31 // pred_fallthru
          _
        %s186 = sand.u32 %s42, 1
        %s187 = scalar_lea.sflag [#allocation3], %s186
        %s188 = sand.u32 %s42, 1
        %s189 = smul.addr %s188, 4
        %s190 = scalar_lea.vmem [#allocation2], %s189
        %p191 = pneg %p55
        %p192 = pneg %p52
        %p193 = pneg %p76
        %p194 = pneg %p73
        %p195 = pneg %p97
        %p196 = pneg %p94
        %p197 = pneg %p125
        %p198 = pneg %p122
        %s199 = sand.u32 %s112, 1
        %s200 = scalar_lea.sflag [#allocation4], %s199
        %s201 = sand.u32 %s112, 1
        %s202 = smul.addr %s201, 4
        %s203 = scalar_lea.vmem [#allocation5], %s202
        %v204 = vld [vmem:[%s181] sm:$0xf]
        %vm205 = vcmask 1043456
        %v206 = vsel %vm205, %v204, 0.0
        %v207 = vrot.slane %v206, 4
        %v208 = vadd.f32 %v206, %v207
        %v209 = vrot.slane %v208, 2
        %v210 = vadd.f32 %v208, %v209
        %v211 = vrot.slane %v210, 1
        %v212 = vadd.f32 %v210, %v211
        %v213 = vmul.f32 %v212, 0.25
        %v214 = vmul.f32 %v204, %v204
        %v215 = vsel %vm205, %v214, 0.0
        %v216 = vrot.slane %v215, 4
        %v217 = vadd.f32 %v215, %v216
        %v218 = vrot.slane %v217, 2
        %v219 = vadd.f32 %v217, %v218
        %v220 = vrot.slane %v219, 1
        %v221 = vadd.f32 %v219, %v220
        %v222 = vmul.f32 %v221, 0.25
        %v223 = vmul.f32 %v213, %v213
        %v224 = vsub.f32 %v222, %v223
        %v225 = vmax.f32 %v224, 0.0
        %v226 = vadd.f32 %v225, 1e-06
        %v227 = vrsqrt.pop %v226
        %v228 = vsub.f32 %v204, %v213
        %v229 = vmul.f32 %v228, %v227
        %v230 = vld [vmem:[%s1] sm:$0xf]
        %232 = vset.pattern.permute.xlu0 0
        %233 = vperm.xlu0 %232, %v230
        %v234 = vpop.permute.xlu0 %233
        %v236 = vmul.f32 %v229, %v234
        %v237 = vld [vmem:[%s2] sm:$0xf]
        %239 = vset.pattern.permute.xlu0 0
        %240 = vperm.xlu0 %239, %v237
        %v241 = vpop.permute.xlu0 %240
        %v243 = vadd.f32 %v236, %v241
        %244 = vst [vmem:[%s203] sm:$0xf] %v243
        %s245 = sand.u32 %s112, 1
        %s246 = scalar_lea.sflag [#allocation4], %s245
        %s247 = sand.u32 %s112, 1
        %s248 = smul.addr %s247, 4
        %s249 = scalar_lea.vmem [#allocation5], %s248
        // Predicated region
        $region37: #{tpu_custom_call.1} parent=31 // pred_check
          %p250 = pneg %p122
        $region38: #{tpu_custom_call.1} parent=31 // pred_check_branch
          %252 = sbr.rel (%p250) target = $region40
        $region39: #{tpu_custom_call.1} parent=31 // pred_region
          %s254 = ssub.s32 64, 64
          %255 = vsyncadd %s246, %s254
          %s256 = smul.addr %s24, 2
          %s257 = sadd.s32 %s25, %s256
          %s258 = smul.addr %s257, 64
          %s259 = scalar_lea.hbm %s3, %s258
          %s261 = sshll.u32 %s249, 4
          %s262 = int_to_ptr.vmem [resolvable:$true] %s261
          %264 = dma.vmem_to_hbm [thread:$0]  %s262, 64, %s259, %s246
        $region40: #{tpu_custom_call.1} parent=31 // pred_fallthru
          _
      $region32: #{tpu_custom_call.1} parent=5 // pred_fallthru
        _
      %p265 = scmp.le.s32.totalorder 2, %s15
      // Predicated region
      $region41: #{tpu_custom_call.1} parent=5 // pred_check
        %p266 = pneg %p265
      $region42: #{tpu_custom_call.1} parent=5 // pred_check_branch
        %268 = sbr.rel (%p266) target = $region44
      $region43: #{tpu_custom_call.1} parent=5 // pred_region
        %s269 = ssub.s32 %s15, 2
        // Predicated region
        $region45: #{tpu_custom_call.1} parent=43 // pred_check
          %p270 = pneg %p128
        $region46: #{tpu_custom_call.1} parent=43 // pred_check_branch
          %272 = sbr.rel (%p270) target = $region48
        $region47: #{tpu_custom_call.1} parent=43 // pred_region
          %s273 = sand.u32 %s113, 1
          %s274 = scalar_lea.sflag [#allocation4], %s273
          %s275 = sand.u32 %s113, 1
          %s276 = smul.addr %s275, 4
          %s277 = scalar_lea.vmem [#allocation5], %s276
          %278 = dma.done %s274, 64
        $region48: #{tpu_custom_call.1} parent=43 // pred_fallthru
          _
      $region44: #{tpu_custom_call.1} parent=5 // pred_fallthru
        _
    $region6: #{tpu_custom_call.1} parent=1 // loop_footer
      %s19 = sadd.s32 1, %s15
    $region7: #{tpu_custom_call.1} parent=1 // loop_footer_branch
      %14 = sbr.rel target = $region3
    $region8: #{tpu_custom_call.1} parent=1 // loop_exit
      _
    %279 = vsyncpa [#allocation3], 1
    %s280 = scalar_lea.sflag [#allocation3], 1
    %281 = vsyncpa %s280, 1
    %282 = vsyncpa [#allocation4], 1
    %s283 = scalar_lea.sflag [#allocation4], 1
    %284 = vsyncpa %s283, 1

</llo_original>
